<compile_context>
chip_gen: v5e
topology: v5e:2x2
jax: 0.10.0
libtpu: 0.0.40
codegen_flags: <defaults>
</compile_context>

<pallas_src>
import numpy as np
import jax
import jax.numpy as jnp
from jax.experimental import pallas as pl
from jax.experimental.pallas import tpu as pltpu


def _round_up(x, m):
    return ((x + m - 1) // m) * m


# ----------------------------------------------------------------------------
# Deterministic parameter init (orthogonal weights, zero biases), matching
# nn.init.orthogonal_ with gain sqrt(2) and nn.init.constant_(bias, 0).
# ----------------------------------------------------------------------------
def orthogonal_(shape, key, gain):
    """PyTorch-style orthogonal init for a [out, in] weight, returned as [in, out]."""
    rows, cols = shape  # (out, in) like torch.nn.Linear.weight
    flat = jax.random.normal(key, (rows, cols), dtype=jnp.float32)
    if rows < cols:
        flat = flat.T
    q, r = jnp.linalg.qr(flat)
    d = jnp.diagonal(r)
    q = q * jnp.where(d >= 0, 1.0, -1.0)[None, :]   # safe sign (no zeroed cols)
    if rows < cols:
        q = q.T
    w = gain * q                         # [out, in]
    return jnp.asarray(w.T, jnp.float32)  # store as [in, out] for x @ W


def make_params(num_inputs, hidden_size, key):
    keys = jax.random.split(key, 5)
    g = float(np.sqrt(2.0))
    return {
        "aw1": orthogonal_((hidden_size, num_inputs), keys[0], g),
        "ab1": jnp.zeros((1, hidden_size), jnp.float32),
        "aw2": orthogonal_((hidden_size, hidden_size), keys[1], g),
        "ab2": jnp.zeros((1, hidden_size), jnp.float32),
        "cw1": orthogonal_((hidden_size, num_inputs), keys[2], g),
        "cb1": jnp.zeros((1, hidden_size), jnp.float32),
        "cw2": orthogonal_((hidden_size, hidden_size), keys[3], g),
        "cb2": jnp.zeros((1, hidden_size), jnp.float32),
        "clw": orthogonal_((1, hidden_size), keys[4], g),   # stored as (H, 1)
        "clb": jnp.zeros((1, 1), jnp.float32),
    }


# ----------------------------------------------------------------------------
# Host-side fusion & packing: 2 slabs instead of 10 separate tensors.
# ----------------------------------------------------------------------------
def pack_params(params):
    F, H = params["aw1"].shape
    H2 = 2 * H

    # Fused layer 1: x @ [Wa1 | Wc1] -> [ha1 | hc1]
    w1 = jnp.concatenate([params["aw1"], params["cw1"]], axis=1)        # (F, 2H)
    # Fused layer 2: block-diagonal -> [ha1 @ Wa2 | hc1 @ Wc2]
    w2 = jnp.zeros((H2, H2), jnp.float32)
    w2 = w2.at[:H, :H].set(params["aw2"])
    w2 = w2.at[H:, H:].set(params["cw2"])
    w_slab = jnp.concatenate([w1, w2], axis=0)                          # (F+2H, 2H)

    b1 = jnp.concatenate([params["ab1"], params["cb1"]], axis=1)        # (1, 2H)
    b2 = jnp.concatenate([params["ab2"], params["cb2"]], axis=1)        # (1, 2H)
    clw_row = params["clw"].reshape(1, H)                               # (1, H)
    clw_masked = jnp.concatenate(
        [jnp.zeros((1, H), jnp.float32), clw_row], axis=1)              # (1, 2H), zero over actor lanes
    clb_row = jnp.full((1, H2), params["clb"][0, 0], jnp.float32)       # (1, 2H)
    pad = jnp.zeros((4, H2), jnp.float32)
    b_slab = jnp.concatenate([b1, b2, clw_masked, clb_row, pad], axis=0)  # (8, 2H)

    return w_slab, b_slab, F, H


# ----------------------------------------------------------------------------
# Pallas kernel: fused actor+critic MLP, one lane-dense output slab.
# ----------------------------------------------------------------------------
def fused_policy_kernel(x_ref, w_ref, b_ref, out_ref):
    F = x_ref.shape[-1]
    H2 = w_ref.shape[-1]
    H = H2 // 2

    x = x_ref[...]                      # (TB, F)
    w1 = w_ref[:F, :]                   # (F, 2H)
    w2 = w_ref[F:, :]                   # (2H, 2H) block-diagonal
    b1 = b_ref[0:1, :]                  # (1, 2H)
    b2 = b_ref[1:2, :]                  # (1, 2H)
    clw = b_ref[2:3, :]                 # (1, 2H), zero over actor half
    clb = b_ref[3:4, :]                 # (1, 2H), clb broadcast over lanes

    # Two 128-lane-wide MXU matmuls + EUP tanh: h = [hidden_actor | hidden_critic]
    h = jnp.tanh(jnp.dot(x, w1, preferred_element_type=jnp.float32) + b1)
    h = jnp.tanh(jnp.dot(h, w2, preferred_element_type=jnp.float32) + b2)   # (TB, 2H)

    # Value head on VPU + XLU (no 2H->1 MXU matmul). clw is lane-masked so the
    # full-width reduce equals hidden_critic @ clw.
    value = jnp.sum(h * clw, axis=-1, keepdims=True) + clb                  # (TB, 2H), every lane = value

    # Single lane-dense (TB, 2H) store: lanes [0,H) = hidden_actor, [H,2H) = value.
    col = jax.lax.broadcasted_iota(jnp.int32, h.shape, 1)
    out_ref[...] = jnp.where(col < H, h, value)


def mlp_base_forward(inputs, rnn_hxs, masks, packed):
    """Equivalent of MLPBase.forward (non-recurrent): returns (value, hidden_actor, rnn_hxs)."""
    del masks  # only used on the recurrent path
    w_slab, b_slab, F, H = packed
    H2 = 2 * H
    B = inputs.shape[0]

    # Batch tile: multiple of 8 sublanes, capped so double-buffered (TB, F) +
    # (TB, 2H) blocks stay tiny vs. v7x's 64 MiB VMEM even for large batches.
    TB = min(256, _round_up(B, 8))
    B_pad = _round_up(B, TB)
    x = inputs
    if B_pad != B:
        x = jnp.pad(x, ((0, B_pad - B), (0, 0)))
    nb = B_pad // TB

    out = pl.pallas_call(
        fused_policy_kernel,
        out_shape=jax.ShapeDtypeStruct((B_pad, H2), jnp.float32),
        grid=(nb,),
        in_specs=[
            pl.BlockSpec((TB, F), lambda i: (i, 0)),                    # batch-tiled activations
            pl.BlockSpec(memory_space=pltpu.MemorySpace.VMEM),          # weight slab (grid-invariant)
            pl.BlockSpec(memory_space=pltpu.MemorySpace.VMEM),          # bias/head slab (grid-invariant)
        ],
        out_specs=pl.BlockSpec((TB, H2), lambda i: (i, 0)),
        compiler_params=pltpu.CompilerParams(
            dimension_semantics=("parallel",)),                         # dual-TC sharding on v7x
    )(x, w_slab, b_slab)

    hidden_actor = out[:B, :H]
    value = out[:B, H:H + 1]
    return value, hidden_actor, rnn_hxs


# ----------------------------------------------------------------------------
# Pure-JAX reference for correctness checking (uses the unfused params).
# ----------------------------------------------------------------------------
def mlp_base_reference(inputs, rnn_hxs, masks, params):
    ha = jnp.tanh(inputs @ params["aw1"] + params["ab1"])
    ha = jnp.tanh(ha @ params["aw2"] + params["ab2"])
    hc = jnp.tanh(inputs @ params["cw1"] + params["cb1"])
    hc = jnp.tanh(hc @ params["cw2"] + params["cb2"])
    value = hc @ params["clw"] + params["clb"]
    return value, ha, rnn_hxs


if __name__ == "__main__":
    B, F, H = 8, 32, 64

    key = jax.random.PRNGKey(0)
    k_in, k_param = jax.random.split(key)

    inputs = jax.random.normal(k_in, (B, F), dtype=jnp.float32)
    rnn_hxs = jnp.zeros((B, 1), jnp.float32)   # recurrent_hidden_state_size == 1
    masks = jnp.ones((B, 1), jnp.float32)

    params = make_params(F, H, k_param)
    packed = pack_params(params)

    value, hidden_actor, rnn_hxs_out = mlp_base_forward(inputs, rnn_hxs, masks, packed)
    value = jax.block_until_ready(value)
    hidden_actor = jax.block_until_ready(hidden_actor)

    v_ref, a_ref, _ = mlp_base_reference(inputs, rnn_hxs, masks, params)
    assert value.shape == (B, 1) and hidden_actor.shape == (B, H)
    assert np.allclose(np.asarray(value), np.asarray(v_ref), atol=1e-5)
    assert np.allclose(np.asarray(hidden_actor), np.asarray(a_ref), atol=1e-5)

    print("KERNEL_OK")
</pallas_src>

<mosaic_0001>
module attributes {stable_mosaic.version = 11 : i64} {
  func.func @fused_policy_kernel(%arg0: i32, %arg1: memref<8x32xf32, #tpu.memory_space<vmem>>, %arg2: memref<160x128xf32, #tpu.memory_space<vmem>>, %arg3: memref<8x128xf32, #tpu.memory_space<vmem>>, %arg4: memref<8x128xf32, #tpu.memory_space<vmem>>) attributes {dimension_semantics = [#tpu.dimension_semantics<parallel>], iteration_bounds = array<i64: 1>, scalar_prefetch = 0 : i64, scratch_operands = 0 : i64, tpu.core_type = #tpu.core_type<tc>, window_params = [{transform_indices = @transform_0, window_bounds = array<i64: 8, 32>}, {pipeline_mode = #tpu.pipeline_mode<synchronous>, transform_indices = @transform_1, window_bounds = array<i64: 160, 128>}, {pipeline_mode = #tpu.pipeline_mode<synchronous>, transform_indices = @transform_2, window_bounds = array<i64: 8, 128>}, {transform_indices = @transform_3, window_bounds = array<i64: 8, 128>}]} {
    %c0 = arith.constant 0 : index
    %c0_0 = arith.constant 0 : index
    %0 = vector.load %arg1[%c0, %c0_0] : memref<8x32xf32, #tpu.memory_space<vmem>>, vector<8x32xf32>
    %c0_1 = arith.constant 0 : index
    %c0_2 = arith.constant 0 : index
    %1 = vector.load %arg2[%c0_1, %c0_2] : memref<160x128xf32, #tpu.memory_space<vmem>>, vector<32x128xf32>
    %c32 = arith.constant 32 : index
    %c0_3 = arith.constant 0 : index
    %2 = vector.load %arg2[%c32, %c0_3] : memref<160x128xf32, #tpu.memory_space<vmem>>, vector<128x128xf32>
    %c0_4 = arith.constant 0 : index
    %c0_5 = arith.constant 0 : index
    %3 = vector.load %arg3[%c0_4, %c0_5] : memref<8x128xf32, #tpu.memory_space<vmem>>, vector<1x128xf32>
    %c1 = arith.constant 1 : index
    %c0_6 = arith.constant 0 : index
    %4 = vector.load %arg3[%c1, %c0_6] : memref<8x128xf32, #tpu.memory_space<vmem>>, vector<1x128xf32>
    %c2 = arith.constant 2 : index
    %c0_7 = arith.constant 0 : index
    %5 = vector.load %arg3[%c2, %c0_7] : memref<8x128xf32, #tpu.memory_space<vmem>>, vector<1x128xf32>
    %c3 = arith.constant 3 : index
    %c0_8 = arith.constant 0 : index
    %6 = vector.load %arg3[%c3, %c0_8] : memref<8x128xf32, #tpu.memory_space<vmem>>, vector<1x128xf32>
    %cst = arith.constant dense<0.000000e+00> : vector<8x128xf32>
    %7 = tpu.matmul %0, %1, %cst {dimension_numbers = #tpu.dot_dimension_numbers<[1], [0], [0], [1], [0, 0, 1, 1], [], []>} : vector<8x32xf32>, vector<32x128xf32>, vector<8x128xf32> -> vector<8x128xf32>
    %8 = vector.broadcast %3 : vector<1x128xf32> to vector<8x128xf32>
    %9 = arith.addf %7, %8 : vector<8x128xf32>
    %10 = math.tanh %9 : vector<8x128xf32>
    %cst_9 = arith.constant dense<0.000000e+00> : vector<8x128xf32>
    %11 = tpu.matmul %10, %2, %cst_9 {dimension_numbers = #tpu.dot_dimension_numbers<[1], [0], [0], [1], [0, 0, 1, 1], [], []>} : vector<8x128xf32>, vector<128x128xf32>, vector<8x128xf32> -> vector<8x128xf32>
    %12 = vector.broadcast %4 : vector<1x128xf32> to vector<8x128xf32>
    %13 = arith.addf %11, %12 : vector<8x128xf32>
    %14 = math.tanh %13 : vector<8x128xf32>
    %15 = vector.broadcast %5 : vector<1x128xf32> to vector<8x128xf32>
    %16 = arith.mulf %14, %15 : vector<8x128xf32>
    %cst_10 = arith.constant dense<0.000000e+00> : vector<8xf32>
    %17 = vector.multi_reduction <add>, %16, %cst_10 [1] : vector<8x128xf32> to vector<8xf32>
    %18 = vector.shape_cast %17 : vector<8xf32> to vector<8x1xf32>
    %19 = vector.broadcast %18 : vector<8x1xf32> to vector<8x128xf32>
    %20 = vector.broadcast %6 : vector<1x128xf32> to vector<8x128xf32>
    %21 = arith.addf %19, %20 : vector<8x128xf32>
    %22 = tpu.iota {dimensions = array<i32: 1>} : vector<8x128xi32>
    %c64_i32 = arith.constant 64 : i32
    %23 = vector.broadcast %c64_i32 : i32 to vector<8x128xi32>
    %24 = arith.cmpi slt, %22, %23 : vector<8x128xi32>
    %25 = arith.select %24, %14, %21 : vector<8x128xi1>, vector<8x128xf32>
    %c0_11 = arith.constant 0 : index
    %c0_12 = arith.constant 0 : index
    %26 = vector.load %arg4[%c0_11, %c0_12] : memref<8x128xf32, #tpu.memory_space<vmem>>, vector<8x128xf32>
    tpu.vector_store %arg4[%c0_11, %c0_12], %25 {strides = array<i32>} : memref<8x128xf32, #tpu.memory_space<vmem>>, vector<8x128xf32>,
    return
  }
  func.func @transform_0(%arg0: i32) -> (i32, i32) {
    %c0_i32 = arith.constant 0 : i32
    %c0_i32_0 = arith.constant 0 : i32
    return %arg0, %c0_i32 : i32, i32
  }
  func.func @transform_1(%arg0: i32) -> (i32, i32) {
    %c0_i32 = arith.constant 0 : i32
    %c0_i32_0 = arith.constant 0 : i32
    %c0_i32_1 = arith.constant 0 : i32
    return %c0_i32, %c0_i32_0 : i32, i32
  }
  func.func @transform_2(%arg0: i32) -> (i32, i32) {
    %c0_i32 = arith.constant 0 : i32
    %c0_i32_0 = arith.constant 0 : i32
    %c0_i32_1 = arith.constant 0 : i32
    return %c0_i32, %c0_i32_0 : i32, i32
  }
  func.func @transform_3(%arg0: i32) -> (i32, i32) {
    %c0_i32 = arith.constant 0 : i32
    %c0_i32_0 = arith.constant 0 : i32
    return %arg0, %c0_i32 : i32, i32
  }
}

</mosaic_0001>

<llo_original>
// kernel: tpu_custom_call.1
$region0: #{tpu_custom_call.1}
  #allocation0 [shape = 'u32[]', space=smem, size = 0x4, offset = 0x4, fixed_abs, tag = 'smem constant byte address 0x4 - core index']
  #allocation1 [shape = 'u32[72,128]{1,0:T(1,128)}', space=vmem, size = 0x9000, scoped, tag = 'internal scratch']
  %s0 = inlined_call_operand.hbm [shape: f32[8,32], index: 0, kind: input, shape index: {}]
  %s1 = inlined_call_operand.hbm [shape: f32[160,128], index: 1, kind: input, shape index: {}]
  %s2 = inlined_call_operand.hbm [shape: f32[8,128], index: 2, kind: input, shape index: {}]
  %s3 = inlined_call_operand.hbm [shape: f32[8,128], index: 3, kind: output, shape index: {}]
  %s4 = sld [smem:[#allocation0]]
  $region34: #{tpu_custom_call.1} parent=0
    _
  %s6 = ssub.s32 1, %s4
  %s7 = scalar_select 0, %s6, %s4
  $region1: #{tpu_custom_call.1} parent=0
    #allocation2 [shape = 'u8[4096]{0}', space=vmem, size = 0x1000, scoped, tag = 'input window, operand 0, single buffered']
    #allocation3 [shape = 's32[1]{0}', space=sflag, size = 0x4, scoped, tag = 'scoped memory for tpu_custom_call.1']
    #allocation4 [shape = 's32[1]{0}', space=sflag, size = 0x4, scoped, tag = 'scoped memory for tpu_custom_call.1']
    #allocation5 [shape = 'u8[81920]{0}', space=vmem, size = 0x14000, scoped, tag = 'input window, operand 1, single buffered']
    #allocation6 [shape = 's32[1]{0}', space=sflag, size = 0x4, scoped, tag = 'scoped memory for tpu_custom_call.1']
    #allocation7 [shape = 'u8[4096]{0}', space=vmem, size = 0x1000, scoped, tag = 'input window, operand 2, single buffered']
    #allocation8 [shape = 'u8[4096]{0}', space=vmem, size = 0x1000, scoped, tag = 'output window, operand 0, single buffered']
    %8 = vsyncpa [#allocation3], 0
    %9 = vsyncpa [#allocation6], 0
    %10 = vsyncpa [#allocation4], 0
    // Predicated region
    $region2: #{tpu_custom_call.1} parent=1 // pred_check
      _
    $region3: #{tpu_custom_call.1} parent=1 // pred_check_branch
      %12 = sbr.rel (0) target = $region5
    $region4: #{tpu_custom_call.1} parent=1 // pred_region
      %14 = vsyncadd [#allocation3], 0
      %s16 = sshll.u32 %s0, 4
      %s17 = int_to_ptr.hbm [resolvable:$true] %s16
      %s18 = sshll.u32 [#allocation2], 4
      %s19 = int_to_ptr.vmem [resolvable:$true] %s18
      %21 = dma.hbm_to_vmem [thread:$0]  %s17, 128, %s19, [#allocation3]
    $region5: #{tpu_custom_call.1} parent=1 // pred_fallthru
      _
    // Predicated region
    $region6: #{tpu_custom_call.1} parent=1 // pred_check
      _
    $region7: #{tpu_custom_call.1} parent=1 // pred_check_branch
      %23 = sbr.rel (0) target = $region9
    $region8: #{tpu_custom_call.1} parent=1 // pred_region
      %25 = vsyncadd [#allocation6], 0
      %s26 = sshll.u32 %s1, 4
      %s27 = int_to_ptr.hbm [resolvable:$true] %s26
      %s28 = sshll.u32 [#allocation5], 4
      %s29 = int_to_ptr.vmem [resolvable:$true] %s28
      %34 = dma.hbm_to_vmem [thread:$0]  %s27, 2560, %s29, [#allocation6], 128, 128, 8
    $region9: #{tpu_custom_call.1} parent=1 // pred_fallthru
      _
    // Predicated region
    $region10: #{tpu_custom_call.1} parent=1 // pred_check
      _
    $region11: #{tpu_custom_call.1} parent=1 // pred_check_branch
      %36 = sbr.rel (0) target = $region13
    $region12: #{tpu_custom_call.1} parent=1 // pred_region
      %38 = vsyncadd [#allocation6], 0
      %s40 = sshll.u32 %s2, 4
      %s41 = int_to_ptr.hbm [resolvable:$true] %s40
      %s42 = sshll.u32 [#allocation7], 4
      %s43 = int_to_ptr.vmem [resolvable:$true] %s42
      %45 = dma.hbm_to_vmem [thread:$0]  %s41, 128, %s43, [#allocation6]
    $region13: #{tpu_custom_call.1} parent=1 // pred_fallthru
      _
    // Predicated region
    $region14: #{tpu_custom_call.1} parent=1 // pred_check
      _
    $region15: #{tpu_custom_call.1} parent=1 // pred_check_branch
      %47 = sbr.rel (0) target = $region17
    $region16: #{tpu_custom_call.1} parent=1 // pred_region
      %49 = dma.done [#allocation3], 128
    $region17: #{tpu_custom_call.1} parent=1 // pred_fallthru
      _
    // Predicated region
    $region18: #{tpu_custom_call.1} parent=1 // pred_check
      _
    $region19: #{tpu_custom_call.1} parent=1 // pred_check_branch
      %51 = sbr.rel (0) target = $region21
    $region20: #{tpu_custom_call.1} parent=1 // pred_region
      %53 = dma.done [#allocation6], 2560
    $region21: #{tpu_custom_call.1} parent=1 // pred_fallthru
      _
    // Predicated region
    $region22: #{tpu_custom_call.1} parent=1 // pred_check
      _
    $region23: #{tpu_custom_call.1} parent=1 // pred_check_branch
      %55 = sbr.rel (0) target = $region25
    $region24: #{tpu_custom_call.1} parent=1 // pred_region
      %57 = dma.done [#allocation6], 128
    $region25: #{tpu_custom_call.1} parent=1 // pred_fallthru
      _
    %v58 = vld [vmem:[#allocation2] sm:$0xff]
    %v59 = vld [vmem:[#allocation5] sm:$0xff]
    %v60 = vld [vmem:[#allocation5 + $0x8] sm:$0xff]
    %v61 = vld [vmem:[#allocation5 + $0x10] sm:$0xff]
    %v62 = vld [vmem:[#allocation5 + $0x18] sm:$0xff]
    %v63 = vld [vmem:[#allocation5 + $0x20] sm:$0xff]
    %v64 = vld [vmem:[#allocation5 + $0x28] sm:$0xff]
    %v65 = vld [vmem:[#allocation5 + $0x30] sm:$0xff]
    %v66 = vld [vmem:[#allocation5 + $0x38] sm:$0xff]
    %v67 = vld [vmem:[#allocation5 + $0x40] sm:$0xff]
    %v68 = vld [vmem:[#allocation5 + $0x48] sm:$0xff]
    %v69 = vld [vmem:[#allocation5 + $0x50] sm:$0xff]
    %v70 = vld [vmem:[#allocation5 + $0x58] sm:$0xff]
    %v71 = vld [vmem:[#allocation5 + $0x60] sm:$0xff]
    %v72 = vld [vmem:[#allocation5 + $0x68] sm:$0xff]
    %v73 = vld [vmem:[#allocation5 + $0x70] sm:$0xff]
    %v74 = vld [vmem:[#allocation5 + $0x78] sm:$0xff]
    %v75 = vld [vmem:[#allocation5 + $0x80] sm:$0xff]
    %v76 = vld [vmem:[#allocation5 + $0x88] sm:$0xff]
    %v77 = vld [vmem:[#allocation5 + $0x90] sm:$0xff]
    %v78 = vld [vmem:[#allocation5 + $0x98] sm:$0xff]
    %v79 = vld [vmem:[#allocation7] sm:$0x1]
    %v80 = vld [vmem:[#allocation7 + $0x1] sm:$0x1]
    %v81 = vld [vmem:[#allocation7 + $0x2] sm:$0x1]
    %v82 = vld [vmem:[#allocation7 + $0x3] sm:$0x1]
    %v83 = vperm.slane %v79, 0
    %vm84 = vcmask 261120
    %v86 = vsel %vm84, %v58, 0
    %88 = vmatpush.msra.mxu0 0.0
    %89 = vmatpush.msra.mxu0 0.0
    %90 = vmatpush.msra.mxu0 0.0
    %91 = vmatpush.msra.mxu0 0.0
    %92 = vmatpush.msra.mxu0 0.0
    %93 = vmatpush.msra.mxu0 0.0
    %94 = vmatpush.msra.mxu0 0.0
    %95 = vmatpush.msra.mxu0 0.0
    %96 = vmatpush.msra.mxu0 0.0
    %97 = vmatpush.msra.mxu0 0.0
    %98 = vmatpush.msra.mxu0 0.0
    %99 = vmatpush.msra.mxu0 0.0
    %100 = vmatpush.msra.mxu0 %v62
    %101 = vmatpush.msra.mxu0 %v61
    %102 = vmatpush.msra.mxu0 %v60
    %103 = vmatpush.msra.mxu0 %v59
    %104 = vmatmul.f32.gmra.mxu0 %v86
    %v105 = vpop.f32.mrf.mxu0
    %v106 = vadd.f32 %v83, %v105
    %107 = vdwg.mxu0
    %v108 = vtanh.pop %v106
    %v109 = vperm.slane %v80, 0
    %110 = vmatpush.msra.mxu0 %v78
    %111 = vmatpush.msra.mxu0 %v77
    %112 = vmatpush.msra.mxu0 %v76
    %113 = vmatpush.msra.mxu0 %v75
    %114 = vmatpush.msra.mxu0 %v74
    %115 = vmatpush.msra.mxu0 %v73
    %116 = vmatpush.msra.mxu0 %v72
    %117 = vmatpush.msra.mxu0 %v71
    %118 = vmatpush.msra.mxu0 %v70
    %119 = vmatpush.msra.mxu0 %v69
    %120 = vmatpush.msra.mxu0 %v68
    %121 = vmatpush.msra.mxu0 %v67
    %122 = vmatpush.msra.mxu0 %v66
    %123 = vmatpush.msra.mxu0 %v65
    %124 = vmatpush.msra.mxu0 %v64
    %125 = vmatpush.msra.mxu0 %v63
    %126 = vmatmul.f32.gmra.mxu0 %v108
    %v127 = vpop.f32.mrf.mxu0
    %v128 = vadd.f32 %v109, %v127
    %129 = vdwg.mxu0
    %v130 = vtanh.pop %v128
    %v131 = vperm.slane %v81, 0
    %v132 = vmul.f32 %v130, %v131
    %133 = vadd.xlane.f32.xlu0 %v132
    %v134 = vpop.xlane.xlu0 %133
    %v135 = vperm.slane %v82, 0
    %v136 = vadd.f32 %v134, %v135
    %v137 = vlaneseq
    %v138 = vand.u32 %v137, 127
    %vm139 = vcmp.lt.s32.totalorder %v138, 64
    %v140 = vsel %vm139, %v130, %v136
    %141 = vst [vmem:[#allocation8] sm:$0xff] %v140
    // Predicated region
    $region26: #{tpu_custom_call.1} parent=1 // pred_check
      _
    $region27: #{tpu_custom_call.1} parent=1 // pred_check_branch
      %143 = sbr.rel (0) target = $region29
    $region28: #{tpu_custom_call.1} parent=1 // pred_region
      %145 = vsyncadd [#allocation4], 0
      %s147 = sshll.u32 [#allocation8], 4
      %s148 = int_to_ptr.vmem [resolvable:$true] %s147
      %s149 = sshll.u32 %s3, 4
      %s150 = int_to_ptr.hbm [resolvable:$true] %s149
      %152 = dma.vmem_to_hbm [thread:$0]  %s148, 128, %s150, [#allocation4]
    $region29: #{tpu_custom_call.1} parent=1 // pred_fallthru
      _
    // Predicated region
    $region30: #{tpu_custom_call.1} parent=1 // pred_check
      _
    $region31: #{tpu_custom_call.1} parent=1 // pred_check_branch
      %154 = sbr.rel (0) target = $region33
    $region32: #{tpu_custom_call.1} parent=1 // pred_region
      %156 = dma.done [#allocation4], 128
    $region33: #{tpu_custom_call.1} parent=1 // pred_fallthru
      _
    %157 = vsyncpa [#allocation3], 1
    %158 = vsyncpa [#allocation6], 1
    %159 = vsyncpa [#allocation4], 1

</llo_original>
